<compile_context>
chip_gen: v5e
topology: v5e:2x2
jax: 0.10.0
libtpu: 0.0.40
codegen_flags: <defaults>
</compile_context>

<pallas_src>
import functools

import jax
import jax.numpy as jnp
from jax.experimental import pallas as pl
from jax.experimental.pallas import tpu as pltpu


def cnn_block_kernel(x_ref, w_ref, gamma_ref, beta_ref, alpha_ref, o_ref, *,
                     dilation, cin):
    """Fused dilated Conv1d + BatchNorm1d (batch stats) + PReLU.

    x_ref:     (B, C_in, L)            VMEM (unpadded input)
    w_ref:     (K, C_out_p, C_in_p)    VMEM (per-tap conv weights, zero-padded)
    gamma_ref: (C_out_p, 1)            VMEM
    beta_ref:  (C_out_p, 1)            VMEM
    alpha_ref: (1, 1)                  SMEM (single PReLU parameter)
    o_ref:     (B, C_out_p, L_out)     VMEM (PyTorch layout, no transpose needed)
    """
    B, _, L = x_ref.shape
    K, _, cin_p = w_ref.shape
    l_out = o_ref.shape[2]

    # Weight taps loaded once (no per-batch / per-tap reloads).
    w_taps = [w_ref[k] for k in range(K)]                  # (C_out_p, C_in_p)

    # ---- Conv1d: K accumulated MXU matmuls per batch (no im2col RHS copy).
    zs = []
    for b in range(B):
        xb = x_ref[b]                                      # (C_in, L)
        if cin_p != cin:
            # Tiny in-kernel sublane pad (one concat per batch), keeps the
            # contraction dim 8-aligned without an HBM copy of x.
            xb = jnp.concatenate(
                [xb, jnp.zeros((cin_p - cin, L), xb.dtype)], axis=0)
        z = jnp.dot(w_taps[0], xb[:, 0:l_out],
                    preferred_element_type=jnp.float32)
        for k in range(1, K):
            s = k * dilation                               # static offsets, K tiny
            z = z + jnp.dot(w_taps[k], xb[:, s:s + l_out],
                            preferred_element_type=jnp.float32)
        zs.append(z)                                       # (C_out_p, L_out) f32

    # ---- BatchNorm1d, training mode: per-channel batch stats over (B, L_out).
    # One-pass sum / sum-of-squares (no padded lanes -> no mask / iota / mod).
    inv_n = 1.0 / (B * l_out)
    s1 = zs[0].sum(axis=1, keepdims=True)
    s2 = (zs[0] * zs[0]).sum(axis=1, keepdims=True)
    for b in range(1, B):
        s1 = s1 + zs[b].sum(axis=1, keepdims=True)
        s2 = s2 + (zs[b] * zs[b]).sum(axis=1, keepdims=True)
    mean = s1 * inv_n
    var = s2 * inv_n - mean * mean                         # biased variance
    scale = gamma_ref[...] * jax.lax.rsqrt(var + 1e-5)     # gamma folded into inv-std
    shift = beta_ref[...] - mean * scale                   # beta folded with mean

    # ---- normalize + PReLU; one store per batch, already in (B, C, L) order.
    alpha = alpha_ref[0, 0]
    for b in range(B):
        y = zs[b] * scale + shift
        o_ref[b] = jnp.where(y >= 0.0, y, alpha * y).astype(o_ref.dtype)


def cnn_block_forward(x, weight, bias, gamma, beta, alpha, *, dilation):
    """x: (B, C_in, L) float32; weight: (C_out, C_in, K) (PyTorch Conv1d layout)."""
    B, Cin, L = x.shape
    Cout, _, K = weight.shape
    L_out = L - dilation * (K - 1)

    def rup(v, m):
        return (v + m - 1) // m * m

    cout_p = rup(Cout, 8)      # sublane-align output channels (zero rows are benign)
    cin_p = rup(Cin, 8)        # 8-aligned contraction (zero cols in the weight only)

    # Per-tap weights (K, C_out_p, C_in_p): w_taps[k][o, c] = weight[o, c, k].
    # This is a tiny constant; x itself is NOT padded or copied in HBM.
    w_taps = jnp.zeros((K, cout_p, cin_p), jnp.float32)
    w_taps = w_taps.at[:, :Cout, :Cin].set(
        jnp.transpose(weight.astype(jnp.float32), (2, 0, 1)))

    g2 = jnp.zeros((cout_p, 1), jnp.float32).at[:Cout, 0].set(gamma.astype(jnp.float32))
    be2 = jnp.zeros((cout_p, 1), jnp.float32).at[:Cout, 0].set(beta.astype(jnp.float32))
    a2 = jnp.reshape(alpha, (1, 1)).astype(jnp.float32)
    del bias  # exactly cancelled by training-mode BatchNorm mean subtraction

    kernel = functools.partial(cnn_block_kernel, dilation=dilation, cin=Cin)
    vmem = pl.BlockSpec(memory_space=pltpu.MemorySpace.VMEM)
    smem = pl.BlockSpec(memory_space=pltpu.MemorySpace.SMEM)

    out = pl.pallas_call(
        kernel,
        out_shape=jax.ShapeDtypeStruct((B, cout_p, L_out), jnp.float32),
        in_specs=[vmem, vmem, vmem, vmem, smem],
        out_specs=vmem,
    )(x.astype(jnp.float32), w_taps, g2, be2, a2)

    # Only slices off zero-padded channel rows (identity when Cout % 8 == 0);
    # no reshape/transpose HBM pass.
    return out[:, :Cout, :]


def cnn_block_reference(x, weight, bias, gamma, beta, alpha, *, dilation):
    """Plain-JAX reference for correctness checking (matches PyTorch forward)."""
    out = jax.lax.conv_general_dilated(
        x, weight, window_strides=(1,), padding="VALID",
        rhs_dilation=(dilation,),
        dimension_numbers=("NCH", "OIH", "NCH"))
    out = out + bias[None, :, None]
    mean = out.mean(axis=(0, 2), keepdims=True)
    var = ((out - mean) ** 2).mean(axis=(0, 2), keepdims=True)
    y = (out - mean) / jnp.sqrt(var + 1e-5)
    y = y * gamma[None, :, None] + beta[None, :, None]
    return jnp.where(y >= 0, y, alpha * y)


if __name__ == "__main__":
    # Module hyperparameters (small, consistent with CnnBlock.__init__).
    input_size = 4      # in_channels
    kernel_size = 3
    num_kernels = 8     # out_channels
    dilation = 2
    batch = 2
    seq_len = 16

    key = jax.random.PRNGKey(0)
    kx, kw, kb = jax.random.split(key, 3)

    # Deterministic synthetic parameters (PyTorch-default-style init scales).
    fan_in = input_size * kernel_size
    bound = 1.0 / (fan_in ** 0.5)
    x = jax.random.normal(kx, (batch, input_size, seq_len), dtype=jnp.float32)
    weight = jax.random.uniform(kw, (num_kernels, input_size, kernel_size),
                                minval=-bound, maxval=bound, dtype=jnp.float32)
    bias = jax.random.uniform(kb, (num_kernels,),
                              minval=-bound, maxval=bound, dtype=jnp.float32)
    gamma = jnp.ones((num_kernels,), jnp.float32)    # BatchNorm weight default
    beta = jnp.zeros((num_kernels,), jnp.float32)    # BatchNorm bias default
    alpha = jnp.float32(0.25)                        # PReLU default

    out = cnn_block_forward(x, weight, bias, gamma, beta, alpha,
                            dilation=dilation)
    out = jax.block_until_ready(out)

    ref = cnn_block_reference(x, weight, bias, gamma, beta, alpha,
                              dilation=dilation)
    assert out.shape == (batch, num_kernels,
                         seq_len - dilation * (kernel_size - 1))
    assert jnp.allclose(out, ref, atol=1e-5, rtol=1e-5)

    print("KERNEL_OK")
</pallas_src>

<mosaic_0001>
module attributes {stable_mosaic.version = 11 : i64} {
  func.func @cnn_block_kernel(%arg0: memref<2x4x16xf32, #tpu.memory_space<vmem>>, %arg1: memref<3x8x8xf32, #tpu.memory_space<vmem>>, %arg2: memref<8x1xf32, #tpu.memory_space<vmem>>, %arg3: memref<8x1xf32, #tpu.memory_space<vmem>>, %arg4: memref<1x1xf32, #tpu.memory_space<smem>>, %arg5: memref<2x8x12xf32, #tpu.memory_space<vmem>>) attributes {dimension_semantics = [], scalar_prefetch = 0 : i64, scratch_operands = 0 : i64, tpu.core_type = #tpu.core_type<tc>} {
    %c0 = arith.constant 0 : index
    %c0_0 = arith.constant 0 : index
    %c0_1 = arith.constant 0 : index
    %0 = vector.load %arg1[%c0, %c0_0, %c0_1] : memref<3x8x8xf32, #tpu.memory_space<vmem>>, vector<1x8x8xf32>
    %1 = vector.shape_cast %0 : vector<1x8x8xf32> to vector<8x8xf32>
    %c1 = arith.constant 1 : index
    %c0_2 = arith.constant 0 : index
    %c0_3 = arith.constant 0 : index
    %2 = vector.load %arg1[%c1, %c0_2, %c0_3] : memref<3x8x8xf32, #tpu.memory_space<vmem>>, vector<1x8x8xf32>
    %3 = vector.shape_cast %2 : vector<1x8x8xf32> to vector<8x8xf32>
    %c2 = arith.constant 2 : index
    %c0_4 = arith.constant 0 : index
    %c0_5 = arith.constant 0 : index
    %4 = vector.load %arg1[%c2, %c0_4, %c0_5] : memref<3x8x8xf32, #tpu.memory_space<vmem>>, vector<1x8x8xf32>
    %5 = vector.shape_cast %4 : vector<1x8x8xf32> to vector<8x8xf32>
    %c0_6 = arith.constant 0 : index
    %c0_7 = arith.constant 0 : index
    %c0_8 = arith.constant 0 : index
    %6 = vector.load %arg0[%c0_6, %c0_7, %c0_8] : memref<2x4x16xf32, #tpu.memory_space<vmem>>, vector<1x4x16xf32>
    %7 = vector.shape_cast %6 : vector<1x4x16xf32> to vector<4x16xf32>
    %cst = arith.constant 0.000000e+00 : f32
    %8 = vector.broadcast %cst : f32 to vector<4x16xf32>
    %9 = tpu.concatenate %7, %8 in 0 : vector<4x16xf32>, vector<4x16xf32> -> vector<8x16xf32>
    %10 = vector.extract_strided_slice %9 {offsets = [0, 0], sizes = [8, 12], strides = [1, 1]} : vector<8x16xf32> to vector<8x12xf32>
    %cst_9 = arith.constant dense<0.000000e+00> : vector<8x12xf32>
    %11 = tpu.matmul %1, %10, %cst_9 {dimension_numbers = #tpu.dot_dimension_numbers<[1], [0], [0], [1], [0, 0, 1, 1], [], []>} : vector<8x8xf32>, vector<8x12xf32>, vector<8x12xf32> -> vector<8x12xf32>
    %12 = vector.extract_strided_slice %9 {offsets = [0, 2], sizes = [8, 12], strides = [1, 1]} : vector<8x16xf32> to vector<8x12xf32>
    %cst_10 = arith.constant dense<0.000000e+00> : vector<8x12xf32>
    %13 = tpu.matmul %3, %12, %cst_10 {dimension_numbers = #tpu.dot_dimension_numbers<[1], [0], [0], [1], [0, 0, 1, 1], [], []>} : vector<8x8xf32>, vector<8x12xf32>, vector<8x12xf32> -> vector<8x12xf32>
    %14 = arith.addf %11, %13 : vector<8x12xf32>
    %15 = vector.extract_strided_slice %9 {offsets = [0, 4], sizes = [8, 12], strides = [1, 1]} : vector<8x16xf32> to vector<8x12xf32>
    %cst_11 = arith.constant dense<0.000000e+00> : vector<8x12xf32>
    %16 = tpu.matmul %5, %15, %cst_11 {dimension_numbers = #tpu.dot_dimension_numbers<[1], [0], [0], [1], [0, 0, 1, 1], [], []>} : vector<8x8xf32>, vector<8x12xf32>, vector<8x12xf32> -> vector<8x12xf32>
    %17 = arith.addf %14, %16 : vector<8x12xf32>
    %c1_12 = arith.constant 1 : index
    %c0_13 = arith.constant 0 : index
    %c0_14 = arith.constant 0 : index
    %18 = vector.load %arg0[%c1_12, %c0_13, %c0_14] : memref<2x4x16xf32, #tpu.memory_space<vmem>>, vector<1x4x16xf32>
    %19 = vector.shape_cast %18 : vector<1x4x16xf32> to vector<4x16xf32>
    %cst_15 = arith.constant 0.000000e+00 : f32
    %20 = vector.broadcast %cst_15 : f32 to vector<4x16xf32>
    %21 = tpu.concatenate %19, %20 in 0 : vector<4x16xf32>, vector<4x16xf32> -> vector<8x16xf32>
    %22 = vector.extract_strided_slice %21 {offsets = [0, 0], sizes = [8, 12], strides = [1, 1]} : vector<8x16xf32> to vector<8x12xf32>
    %cst_16 = arith.constant dense<0.000000e+00> : vector<8x12xf32>
    %23 = tpu.matmul %1, %22, %cst_16 {dimension_numbers = #tpu.dot_dimension_numbers<[1], [0], [0], [1], [0, 0, 1, 1], [], []>} : vector<8x8xf32>, vector<8x12xf32>, vector<8x12xf32> -> vector<8x12xf32>
    %24 = vector.extract_strided_slice %21 {offsets = [0, 2], sizes = [8, 12], strides = [1, 1]} : vector<8x16xf32> to vector<8x12xf32>
    %cst_17 = arith.constant dense<0.000000e+00> : vector<8x12xf32>
    %25 = tpu.matmul %3, %24, %cst_17 {dimension_numbers = #tpu.dot_dimension_numbers<[1], [0], [0], [1], [0, 0, 1, 1], [], []>} : vector<8x8xf32>, vector<8x12xf32>, vector<8x12xf32> -> vector<8x12xf32>
    %26 = arith.addf %23, %25 : vector<8x12xf32>
    %27 = vector.extract_strided_slice %21 {offsets = [0, 4], sizes = [8, 12], strides = [1, 1]} : vector<8x16xf32> to vector<8x12xf32>
    %cst_18 = arith.constant dense<0.000000e+00> : vector<8x12xf32>
    %28 = tpu.matmul %5, %27, %cst_18 {dimension_numbers = #tpu.dot_dimension_numbers<[1], [0], [0], [1], [0, 0, 1, 1], [], []>} : vector<8x8xf32>, vector<8x12xf32>, vector<8x12xf32> -> vector<8x12xf32>
    %29 = arith.addf %26, %28 : vector<8x12xf32>
    %cst_19 = arith.constant dense<0.000000e+00> : vector<8xf32>
    %30 = vector.multi_reduction <add>, %17, %cst_19 [1] : vector<8x12xf32> to vector<8xf32>
    %31 = vector.shape_cast %30 : vector<8xf32> to vector<8x1xf32>
    %32 = arith.mulf %17, %17 : vector<8x12xf32>
    %cst_20 = arith.constant dense<0.000000e+00> : vector<8xf32>
    %33 = vector.multi_reduction <add>, %32, %cst_20 [1] : vector<8x12xf32> to vector<8xf32>
    %34 = vector.shape_cast %33 : vector<8xf32> to vector<8x1xf32>
    %cst_21 = arith.constant dense<0.000000e+00> : vector<8xf32>
    %35 = vector.multi_reduction <add>, %29, %cst_21 [1] : vector<8x12xf32> to vector<8xf32>
    %36 = vector.shape_cast %35 : vector<8xf32> to vector<8x1xf32>
    %37 = arith.addf %31, %36 : vector<8x1xf32>
    %38 = arith.mulf %29, %29 : vector<8x12xf32>
    %cst_22 = arith.constant dense<0.000000e+00> : vector<8xf32>
    %39 = vector.multi_reduction <add>, %38, %cst_22 [1] : vector<8x12xf32> to vector<8xf32>
    %40 = vector.shape_cast %39 : vector<8xf32> to vector<8x1xf32>
    %41 = arith.addf %34, %40 : vector<8x1xf32>
    %cst_23 = arith.constant 0.0416666679 : f32
    %42 = vector.broadcast %cst_23 : f32 to vector<8x1xf32>
    %43 = arith.mulf %37, %42 : vector<8x1xf32>
    %cst_24 = arith.constant 0.0416666679 : f32
    %44 = vector.broadcast %cst_24 : f32 to vector<8x1xf32>
    %45 = arith.mulf %41, %44 : vector<8x1xf32>
    %46 = arith.mulf %43, %43 : vector<8x1xf32>
    %47 = arith.subf %45, %46 : vector<8x1xf32>
    %c0_25 = arith.constant 0 : index
    %c0_26 = arith.constant 0 : index
    %48 = vector.load %arg2[%c0_25, %c0_26] : memref<8x1xf32, #tpu.memory_space<vmem>>, vector<8x1xf32>
    %cst_27 = arith.constant 9.99999974E-6 : f32
    %49 = vector.broadcast %cst_27 : f32 to vector<8x1xf32>
    %50 = arith.addf %47, %49 : vector<8x1xf32>
    %51 = math.rsqrt %50 : vector<8x1xf32>
    %52 = arith.mulf %48, %51 : vector<8x1xf32>
    %c0_28 = arith.constant 0 : index
    %c0_29 = arith.constant 0 : index
    %53 = vector.load %arg3[%c0_28, %c0_29] : memref<8x1xf32, #tpu.memory_space<vmem>>, vector<8x1xf32>
    %54 = arith.mulf %43, %52 : vector<8x1xf32>
    %55 = arith.subf %53, %54 : vector<8x1xf32>
    %c0_30 = arith.constant 0 : index
    %c0_31 = arith.constant 0 : index
    %56 = memref.load %arg4[%c0_30, %c0_31] : memref<1x1xf32, #tpu.memory_space<smem>>
    %57 = vector.broadcast %52 : vector<8x1xf32> to vector<8x12xf32>
    %58 = arith.mulf %17, %57 : vector<8x12xf32>
    %59 = vector.broadcast %55 : vector<8x1xf32> to vector<8x12xf32>
    %60 = arith.addf %58, %59 : vector<8x12xf32>
    %cst_32 = arith.constant 0.000000e+00 : f32
    %61 = vector.broadcast %cst_32 : f32 to vector<8x12xf32>
    %62 = arith.cmpf oge, %60, %61 : vector<8x12xf32>
    %63 = vector.broadcast %56 : f32 to vector<8x12xf32>
    %64 = arith.mulf %63, %60 : vector<8x12xf32>
    %65 = arith.select %62, %60, %64 : vector<8x12xi1>, vector<8x12xf32>
    %c0_33 = arith.constant 0 : index
    %c0_34 = arith.constant 0 : index
    %c0_35 = arith.constant 0 : index
    %66 = vector.load %arg5[%c0_33, %c0_34, %c0_35] : memref<2x8x12xf32, #tpu.memory_space<vmem>>, vector<1x8x12xf32>
    %67 = vector.shape_cast %66 : vector<1x8x12xf32> to vector<8x12xf32>
    %68 = vector.shape_cast %65 : vector<8x12xf32> to vector<1x8x12xf32>
    tpu.vector_store %arg5[%c0_33, %c0_34, %c0_35], %68 {strides = array<i32>} : memref<2x8x12xf32, #tpu.memory_space<vmem>>, vector<1x8x12xf32>,
    %69 = vector.broadcast %52 : vector<8x1xf32> to vector<8x12xf32>
    %70 = arith.mulf %29, %69 : vector<8x12xf32>
    %71 = vector.broadcast %55 : vector<8x1xf32> to vector<8x12xf32>
    %72 = arith.addf %70, %71 : vector<8x12xf32>
    %cst_36 = arith.constant 0.000000e+00 : f32
    %73 = vector.broadcast %cst_36 : f32 to vector<8x12xf32>
    %74 = arith.cmpf oge, %72, %73 : vector<8x12xf32>
    %75 = vector.broadcast %56 : f32 to vector<8x12xf32>
    %76 = arith.mulf %75, %72 : vector<8x12xf32>
    %77 = arith.select %74, %72, %76 : vector<8x12xi1>, vector<8x12xf32>
    %c1_37 = arith.constant 1 : index
    %c0_38 = arith.constant 0 : index
    %c0_39 = arith.constant 0 : index
    %78 = vector.load %arg5[%c1_37, %c0_38, %c0_39] : memref<2x8x12xf32, #tpu.memory_space<vmem>>, vector<1x8x12xf32>
    %79 = vector.shape_cast %78 : vector<1x8x12xf32> to vector<8x12xf32>
    %80 = vector.shape_cast %77 : vector<8x12xf32> to vector<1x8x12xf32>
    tpu.vector_store %arg5[%c1_37, %c0_38, %c0_39], %80 {strides = array<i32>} : memref<2x8x12xf32, #tpu.memory_space<vmem>>, vector<1x8x12xf32>,
    return
  }
}

</mosaic_0001>

<llo_original>
// kernel: tpu_custom_call.1
$region0: #{tpu_custom_call.1}
  #allocation0 [shape = 'u32[]', space=smem, size = 0x4, offset = 0x4, fixed_abs, tag = 'smem constant byte address 0x4 - core index']
  #allocation1 [shape = 'u32[72,128]{1,0:T(1,128)}', space=vmem, size = 0x9000, scoped, tag = 'internal scratch']
  #allocation2 [shape = 'f32[1,1]{1,0:T(1,128)S(6)}', space=smem, size = 0x200, scoped, tag = 'scoped memory for tpu_custom_call.1']
  %s0 = inlined_call_operand.vmem [shape: f32[2,4,16], index: 0, kind: input, shape index: {}]
  %s1 = inlined_call_operand.hbm [shape: f32[3,8,8], index: 1, kind: input, shape index: {}]
  %s2 = inlined_call_operand.vmem [shape: f32[8,1], index: 2, kind: input, shape index: {}]
  %s3 = inlined_call_operand.vmem [shape: f32[8,1], index: 3, kind: input, shape index: {}]
  %s4 = inlined_call_operand.<no memory space> [shape: f32[1,1], index: 4, kind: input, shape index: {}]
  %s5 = inlined_call_operand.hbm [shape: f32[2,8,12], index: 5, kind: output, shape index: {}]
  %s6 = sld [smem:[#allocation0]]
  $region34: #{tpu_custom_call.1} parent=0
    _
  %s8 = ssub.s32 1, %s6
  %s9 = scalar_select 0, %s8, %s6
  %10 = sst [smem:[#allocation2]] %s4
  $region1: #{tpu_custom_call.1} parent=0
    #allocation3 [shape = 'u8[12288]{0}', space=vmem, size = 0x3000, scoped, tag = 'input window, operand 1, single buffered']
    #allocation4 [shape = 's32[1]{0}', space=sflag, size = 0x4, scoped, tag = 'scoped memory for tpu_custom_call.1']
    #allocation5 [shape = 's32[1]{0}', space=sflag, size = 0x4, scoped, tag = 'scoped memory for tpu_custom_call.1']
    #allocation6 [shape = 'u8[8192]{0}', space=vmem, size = 0x2000, scoped, tag = 'output window, operand 0, single buffered']
    %11 = vsyncpa [#allocation4], 0
    %12 = vsyncpa [#allocation5], 0
    // Predicated region
    $region2: #{tpu_custom_call.1} parent=1 // pred_check
      _
    $region3: #{tpu_custom_call.1} parent=1 // pred_check_branch
      %14 = sbr.rel (0) target = $region5
    $region4: #{tpu_custom_call.1} parent=1 // pred_region
      _
    $region5: #{tpu_custom_call.1} parent=1 // pred_fallthru
      _
    // Predicated region
    $region6: #{tpu_custom_call.1} parent=1 // pred_check
      _
    $region7: #{tpu_custom_call.1} parent=1 // pred_check_branch
      %16 = sbr.rel (0) target = $region9
    $region8: #{tpu_custom_call.1} parent=1 // pred_region
      %18 = vsyncadd [#allocation4], 0
      %s19 = sshll.u32 %s1, 4
      %s20 = int_to_ptr.hbm [resolvable:$true] %s19
      %s21 = sshll.u32 [#allocation3], 4
      %s22 = int_to_ptr.vmem [resolvable:$true] %s21
      %27 = dma.hbm_to_vmem [thread:$0]  %s20, 384, %s22, [#allocation4], 128, 128, 8
    $region9: #{tpu_custom_call.1} parent=1 // pred_fallthru
      _
    // Predicated region
    $region10: #{tpu_custom_call.1} parent=1 // pred_check
      _
    $region11: #{tpu_custom_call.1} parent=1 // pred_check_branch
      %29 = sbr.rel (0) target = $region13
    $region12: #{tpu_custom_call.1} parent=1 // pred_region
      _
    $region13: #{tpu_custom_call.1} parent=1 // pred_fallthru
      _
    // Predicated region
    $region14: #{tpu_custom_call.1} parent=1 // pred_check
      _
    $region15: #{tpu_custom_call.1} parent=1 // pred_check_branch
      %31 = sbr.rel (0) target = $region17
    $region16: #{tpu_custom_call.1} parent=1 // pred_region
      _
    $region17: #{tpu_custom_call.1} parent=1 // pred_fallthru
      _
    // Predicated region
    $region18: #{tpu_custom_call.1} parent=1 // pred_check
      _
    $region19: #{tpu_custom_call.1} parent=1 // pred_check_branch
      %33 = sbr.rel (0) target = $region21
    $region20: #{tpu_custom_call.1} parent=1 // pred_region
      _
    $region21: #{tpu_custom_call.1} parent=1 // pred_fallthru
      _
    // Predicated region
    $region22: #{tpu_custom_call.1} parent=1 // pred_check
      _
    $region23: #{tpu_custom_call.1} parent=1 // pred_check_branch
      %35 = sbr.rel (0) target = $region25
    $region24: #{tpu_custom_call.1} parent=1 // pred_region
      %37 = dma.done [#allocation4], 384
    $region25: #{tpu_custom_call.1} parent=1 // pred_fallthru
      _
    %v38 = vld [vmem:[#allocation3] sm:$0xff]
    %s39 = scalar_lea.vmem [#allocation3], 8
    %v40 = vld [vmem:[%s39] sm:$0xff]
    %s41 = scalar_lea.vmem [#allocation3], 16
    %v42 = vld [vmem:[%s41] sm:$0xff]
    %v43 = vld [vmem:[%s0] sm:$0xf]
    %vm44 = vcmask 1043456
    %v45 = vsel %vm44, %v43, 0.0
    %47 = vrot.lane.b32.xlu0 %v45, 126
    %v48 = vpop.permute.xlu0 %47
    %vm50 = vcmask 64512
    %v52 = vsel %vm50, %v40, 0
    %54 = vmatpush.msra.mxu0 0.0
    %55 = vmatpush.msra.mxu0 0.0
    %56 = vmatpush.msra.mxu0 0.0
    %57 = vmatpush.msra.mxu0 0.0
    %58 = vmatpush.msra.mxu0 0.0
    %59 = vmatpush.msra.mxu0 0.0
    %60 = vmatpush.msra.mxu0 0.0
    %61 = vmatpush.msra.mxu0 0.0
    %62 = vmatpush.msra.mxu0 0.0
    %63 = vmatpush.msra.mxu0 0.0
    %64 = vmatpush.msra.mxu0 0.0
    %65 = vmatpush.msra.mxu0 0.0
    %66 = vmatpush.msra.mxu0 0.0
    %67 = vmatpush.msra.mxu0 0.0
    %68 = vmatpush.msra.mxu0 0.0
    %69 = vmatpush.msra.mxu0 %v48
    %70 = vmatmul.f32.gmra.mxu0 %v52
    %v71 = vpop.f32.mrf.mxu0
    %v72 = vadd.f32 0.0, %v71
    %73 = vdwg.mxu0
    %v75 = vsel %vm50, %v38, 0
    %77 = vmatpush.msra.mxu0 0.0
    %78 = vmatpush.msra.mxu0 0.0
    %79 = vmatpush.msra.mxu0 0.0
    %80 = vmatpush.msra.mxu0 0.0
    %81 = vmatpush.msra.mxu0 0.0
    %82 = vmatpush.msra.mxu0 0.0
    %83 = vmatpush.msra.mxu0 0.0
    %84 = vmatpush.msra.mxu0 0.0
    %85 = vmatpush.msra.mxu0 0.0
    %86 = vmatpush.msra.mxu0 0.0
    %87 = vmatpush.msra.mxu0 0.0
    %88 = vmatpush.msra.mxu0 0.0
    %89 = vmatpush.msra.mxu0 0.0
    %90 = vmatpush.msra.mxu0 0.0
    %91 = vmatpush.msra.mxu0 0.0
    %92 = vmatpush.msra.mxu0 %v45
    %93 = vmatmul.f32.gmra.mxu0 %v75
    %v94 = vpop.f32.mrf.mxu0
    %v95 = vadd.f32 %v72, %v94
    %96 = vdwg.mxu0
    %97 = vrot.lane.b32.xlu0 %v45, 124
    %v98 = vpop.permute.xlu0 %97
    %v101 = vsel %vm50, %v42, 0
    %103 = vmatpush.msra.mxu0 0.0
    %104 = vmatpush.msra.mxu0 0.0
    %105 = vmatpush.msra.mxu0 0.0
    %106 = vmatpush.msra.mxu0 0.0
    %107 = vmatpush.msra.mxu0 0.0
    %108 = vmatpush.msra.mxu0 0.0
    %109 = vmatpush.msra.mxu0 0.0
    %110 = vmatpush.msra.mxu0 0.0
    %111 = vmatpush.msra.mxu0 0.0
    %112 = vmatpush.msra.mxu0 0.0
    %113 = vmatpush.msra.mxu0 0.0
    %114 = vmatpush.msra.mxu0 0.0
    %115 = vmatpush.msra.mxu0 0.0
    %116 = vmatpush.msra.mxu0 0.0
    %117 = vmatpush.msra.mxu0 0.0
    %118 = vmatpush.msra.mxu0 %v98
    %119 = vmatmul.f32.gmra.mxu0 %v101
    %v120 = vpop.f32.mrf.mxu0
    %v121 = vadd.f32 0.0, %v120
    %122 = vdwg.mxu0
    %v123 = vadd.f32 %v95, %v121
    %s124 = scalar_lea.vmem %s0, 4
    %v125 = vld [vmem:[%s124] sm:$0xf]
    %v126 = vsel %vm44, %v125, 0.0
    %128 = vrot.lane.b32.xlu0 %v126, 126
    %v129 = vpop.permute.xlu0 %128
    %131 = vmatpush.msra.mxu0 0.0
    %132 = vmatpush.msra.mxu0 0.0
    %133 = vmatpush.msra.mxu0 0.0
    %134 = vmatpush.msra.mxu0 0.0
    %135 = vmatpush.msra.mxu0 0.0
    %136 = vmatpush.msra.mxu0 0.0
    %137 = vmatpush.msra.mxu0 0.0
    %138 = vmatpush.msra.mxu0 0.0
    %139 = vmatpush.msra.mxu0 0.0
    %140 = vmatpush.msra.mxu0 0.0
    %141 = vmatpush.msra.mxu0 0.0
    %142 = vmatpush.msra.mxu0 0.0
    %143 = vmatpush.msra.mxu0 0.0
    %144 = vmatpush.msra.mxu0 0.0
    %145 = vmatpush.msra.mxu0 0.0
    %146 = vmatpush.msra.mxu0 %v129
    %147 = vmatmul.f32.gmra.mxu0 %v52
    %v148 = vpop.f32.mrf.mxu0
    %v149 = vadd.f32 0.0, %v148
    %150 = vdwg.mxu0
    %151 = vmatpush.msra.mxu0 0.0
    %152 = vmatpush.msra.mxu0 0.0
    %153 = vmatpush.msra.mxu0 0.0
    %154 = vmatpush.msra.mxu0 0.0
    %155 = vmatpush.msra.mxu0 0.0
    %156 = vmatpush.msra.mxu0 0.0
    %157 = vmatpush.msra.mxu0 0.0
    %158 = vmatpush.msra.mxu0 0.0
    %159 = vmatpush.msra.mxu0 0.0
    %160 = vmatpush.msra.mxu0 0.0
    %161 = vmatpush.msra.mxu0 0.0
    %162 = vmatpush.msra.mxu0 0.0
    %163 = vmatpush.msra.mxu0 0.0
    %164 = vmatpush.msra.mxu0 0.0
    %165 = vmatpush.msra.mxu0 0.0
    %166 = vmatpush.msra.mxu0 %v126
    %167 = vmatmul.f32.gmra.mxu0 %v75
    %v168 = vpop.f32.mrf.mxu0
    %v169 = vadd.f32 %v149, %v168
    %170 = vdwg.mxu0
    %171 = vrot.lane.b32.xlu0 %v126, 124
    %v172 = vpop.permute.xlu0 %171
    %174 = vmatpush.msra.mxu0 0.0
    %175 = vmatpush.msra.mxu0 0.0
    %176 = vmatpush.msra.mxu0 0.0
    %177 = vmatpush.msra.mxu0 0.0
    %178 = vmatpush.msra.mxu0 0.0
    %179 = vmatpush.msra.mxu0 0.0
    %180 = vmatpush.msra.mxu0 0.0
    %181 = vmatpush.msra.mxu0 0.0
    %182 = vmatpush.msra.mxu0 0.0
    %183 = vmatpush.msra.mxu0 0.0
    %184 = vmatpush.msra.mxu0 0.0
    %185 = vmatpush.msra.mxu0 0.0
    %186 = vmatpush.msra.mxu0 0.0
    %187 = vmatpush.msra.mxu0 0.0
    %188 = vmatpush.msra.mxu0 0.0
    %189 = vmatpush.msra.mxu0 %v172
    %190 = vmatmul.f32.gmra.mxu0 %v101
    %v191 = vpop.f32.mrf.mxu0
    %v192 = vadd.f32 0.0, %v191
    %193 = vdwg.mxu0
    %v194 = vadd.f32 %v169, %v192
    %vm195 = vcmask 97280
    %v196 = vsel %vm195, %v123, 0.0
    %197 = vadd.xlane.f32.xlu0 %v196
    %v198 = vpop.xlane.xlu0 %197
    %v199 = vmul.f32 %v123, %v123
    %v200 = vsel %vm195, %v199, 0.0
    %201 = vadd.xlane.f32.xlu0 %v200
    %v202 = vpop.xlane.xlu0 %201
    %v203 = vsel %vm195, %v194, 0.0
    %204 = vadd.xlane.f32.xlu0 %v203
    %v205 = vpop.xlane.xlu0 %204
    %v206 = vadd.f32 %v198, %v205
    %v207 = vmul.f32 %v194, %v194
    %v208 = vsel %vm195, %v207, 0.0
    %209 = vadd.xlane.f32.xlu0 %v208
    %v210 = vpop.xlane.xlu0 %209
    %v211 = vadd.f32 %v202, %v210
    %v212 = vmul.f32 %v206, 0.041666668
    %v213 = vmul.f32 %v211, 0.041666668
    %v214 = vmul.f32 %v212, %v212
    %v215 = vsub.f32 %v213, %v214
    %v216 = vld [vmem:[%s2] sm:$0xff]
    %v217 = vadd.f32 %v215, 1e-05
    %v218 = vrsqrt.pop %v217
    %v219 = vmul.f32 %v218, %v217
    %v220 = vmul.f32 %v219, %v218
    %v221 = vmul.f32 0.5, %v220
    %v222 = vsub.f32 1.5, %v221
    %v223 = vmul.f32 %v218, %v222
    %vm224 = vweird.f32 %v217
    %vm225 = vweird.f32 %v218
    %vm226 = vmor %vm224, %vm225
    %v227 = vsel %vm226, %v218, %v223
    %v228 = vmul.f32 %v216, %v227
    %v229 = vld [vmem:[%s3] sm:$0xff]
    %v230 = vmul.f32 %v212, %v228
    %v231 = vsub.f32 %v229, %v230
    %s232 = sld [smem:[#allocation2]]
    %234 = vset.pattern.permute.xlu0 0
    %235 = vperm.xlu0 %234, %v228
    %v236 = vpop.permute.xlu0 %235
    %v238 = vmul.f32 %v123, %v236
    %240 = vset.pattern.permute.xlu0 0
    %241 = vperm.xlu0 %240, %v231
    %v242 = vpop.permute.xlu0 %241
    %v244 = vadd.f32 %v238, %v242
    %vm245 = vcmp.ge.f32.partialorder %v244, 0.0
    %v246 = vstv %s232
    %v247 = vmul.f32 %v246, %v244
    %v248 = vsel %vm245, %v244, %v247
    %249 = vst.msk [vmem:[#allocation6] sm:$0xff] %vm195, %v248
    %v250 = vmul.f32 %v194, %v236
    %v251 = vadd.f32 %v250, %v242
    %vm252 = vcmp.ge.f32.partialorder %v251, 0.0
    %v253 = vmul.f32 %v246, %v251
    %v254 = vsel %vm252, %v251, %v253
    %s255 = scalar_lea.vmem [#allocation6], 8
    %256 = vst.msk [vmem:[%s255] sm:$0xff] %vm195, %v254
    // Predicated region
    $region26: #{tpu_custom_call.1} parent=1 // pred_check
      _
    $region27: #{tpu_custom_call.1} parent=1 // pred_check_branch
      %258 = sbr.rel (0) target = $region29
    $region28: #{tpu_custom_call.1} parent=1 // pred_region
      %260 = vsyncadd [#allocation5], 0
      %s261 = sshll.u32 [#allocation6], 4
      %s262 = int_to_ptr.vmem [resolvable:$true] %s261
      %s263 = sshll.u32 %s5, 4
      %s264 = int_to_ptr.hbm [resolvable:$true] %s263
      %269 = dma.vmem_to_hbm [thread:$0]  %s262, 256, %s264, [#allocation5], 128, 128, 8
    $region29: #{tpu_custom_call.1} parent=1 // pred_fallthru
      _
    // Predicated region
    $region30: #{tpu_custom_call.1} parent=1 // pred_check
      _
    $region31: #{tpu_custom_call.1} parent=1 // pred_check_branch
      %271 = sbr.rel (0) target = $region33
    $region32: #{tpu_custom_call.1} parent=1 // pred_region
      %273 = dma.done [#allocation5], 256
    $region33: #{tpu_custom_call.1} parent=1 // pred_fallthru
      _
    %274 = vsyncpa [#allocation4], 1
    %275 = vsyncpa [#allocation5], 1

</llo_original>
